<compile_context>
chip_gen: v7x
topology: tpu7x:2x2x1
jax: 0.10.0
libtpu: 0.0.40
codegen_flags: <defaults>
</compile_context>

<pallas_src>
import functools

import jax
import jax.numpy as jnp
from jax import lax
from jax.experimental import pallas as pl
from jax.experimental.pallas import tpu as pltpu


def _vq_kernel(x_ref, et_ref, e_ref, o_ref):
    # x_ref : (TN, C)  tile of flattened activations
    # et_ref: (C, K)   codebook, transposed (score matmul)
    # e_ref : (K, C)   codebook             (one-hot gather matmul)
    # o_ref : (TN, C)  quantized output tile
    x = x_ref[...].astype(jnp.float32)        # (TN, C)
    e_t = et_ref[...].astype(jnp.float32)     # (C, K)
    e = e_ref[...].astype(jnp.float32)        # (K, C)
    TN = x.shape[0]
    K = e.shape[0]

    # scores[i, k] = ||e_k||^2 - 2 * x_i . e_k   (same argmin as ||x_i - e_k||)
    e_sq = jnp.sum(e_t * e_t, axis=0, keepdims=True)               # (1, K)
    cross = jnp.dot(x, e_t, preferred_element_type=jnp.float32)    # (TN, K) on MXU
    scores = e_sq - 2.0 * cross                                    # (TN, K)

    # argmin over k with first-index tie-break (matches torch.argmin).
    lane_idx = lax.broadcasted_iota(jnp.int32, (TN, K), 1).astype(jnp.float32)
    min_s = jnp.min(scores, axis=1, keepdims=True)                 # (TN, 1)
    idx = jnp.min(jnp.where(scores <= min_s, lane_idx, float(K)),
                  axis=1, keepdims=True)                           # (TN, 1), exact ints in f32

    # Gather E[idx] as a one-hot matmul (exactly one 1.0 per row -> exact copy).
    onehot = (lane_idx == idx).astype(jnp.float32)                 # (TN, K)
    o_ref[...] = jnp.dot(onehot, e,
                         preferred_element_type=jnp.float32).astype(o_ref.dtype)


@functools.partial(jax.jit, static_argnames=("tile_n",))
def vector_quantize(x_nchw, codebook, *, tile_n=128):
    """x_nchw: (B, C, H, W); codebook: (K, C). Returns quantized (B, C, H, W)."""
    B, C, H, W = x_nchw.shape
    K, Cd = codebook.shape
    assert Cd == C, "dim_embeddings must equal the channel dim of x"

    # Layout plumbing: NCHW -> (N, C) rows.  If this module sits inside a
    # larger NHWC model, hoist this transpose out of the per-call wrapper.
    x_flat = jnp.transpose(x_nchw, (0, 2, 3, 1)).reshape(B * H * W, C)
    N = B * H * W
    grid_n = pl.cdiv(N, tile_n)
    n_pad = grid_n * tile_n
    if n_pad != N:
        x_flat = jnp.pad(x_flat, ((0, n_pad - N), (0, 0)))

    e_t = jnp.transpose(codebook, (1, 0))  # (C, K), tiny

    out_flat = pl.pallas_call(
        _vq_kernel,
        out_shape=jax.ShapeDtypeStruct((n_pad, C), x_nchw.dtype),
        grid_spec=pltpu.PrefetchScalarGridSpec(
            num_scalar_prefetch=0,
            grid=(grid_n,),
            in_specs=[
                pl.BlockSpec((tile_n, C), lambda i: (i, 0)),
                pl.BlockSpec((C, K), lambda i: (0, 0)),
                pl.BlockSpec((K, C), lambda i: (0, 0)),
            ],
            out_specs=pl.BlockSpec((tile_n, C), lambda i: (i, 0)),
        ),
        compiler_params=pltpu.CompilerParams(
            dimension_semantics=("parallel",)),
    )(x_flat, e_t, codebook)

    out = out_flat[:N].reshape(B, H, W, C)
    return jnp.transpose(out, (0, 3, 1, 2))


def _reference(x_nchw, codebook):
    """Pure-JAX mirror of the PyTorch forward (default return_indices=False)."""
    B, C, H, W = x_nchw.shape
    xf = jnp.transpose(x_nchw, (0, 2, 3, 1)).reshape(-1, C)
    d = jnp.linalg.norm(xf[:, None, :] - codebook[None, :, :], axis=2)
    idx = jnp.argmin(d, axis=1)
    q = codebook[idx]
    return jnp.transpose(q.reshape(B, H, W, C), (0, 3, 1, 2))


if __name__ == "__main__":
    B, C, H, W = 2, 4, 16, 16          # C == dim_embeddings
    num_embeddings = 32

    key = jax.random.PRNGKey(0)
    kx, ke = jax.random.split(key)
    x = jax.random.normal(kx, (B, C, H, W), dtype=jnp.float32)
    # Matches nn.Embedding init in the module: uniform(-1/K, 1/K).
    codebook = jax.random.uniform(
        ke, (num_embeddings, C), dtype=jnp.float32,
        minval=-1.0 / num_embeddings, maxval=1.0 / num_embeddings)

    out = vector_quantize(x, codebook)
    jax.block_until_ready(out)

    ref = _reference(x, codebook)
    assert out.shape == (B, C, H, W)
    assert jnp.allclose(out, ref, atol=1e-6, rtol=1e-6)

    # TODO(synk): return_indices=True branch not emitted; idx is already
    # computed in-kernel and could be exposed as a second (B, H, W) output.
    print("KERNEL_OK")
</pallas_src>

<mosaic_0001>
module attributes {stable_mosaic.version = 11 : i64} {
  func.func @_vq_kernel(%arg0: i32, %arg1: memref<128x4xf32, #tpu.memory_space<vmem>>, %arg2: memref<4x32xf32, #tpu.memory_space<vmem>>, %arg3: memref<32x4xf32, #tpu.memory_space<vmem>>, %arg4: memref<128x4xf32, #tpu.memory_space<vmem>>) attributes {dimension_semantics = [#tpu.dimension_semantics<parallel>], iteration_bounds = array<i64: 4>, scalar_prefetch = 0 : i64, scratch_operands = 0 : i64, tpu.core_type = #tpu.core_type<tc>, window_params = [{transform_indices = @transform_0, window_bounds = array<i64: 128, 4>}, {pipeline_mode = #tpu.pipeline_mode<synchronous>, transform_indices = @transform_1, window_bounds = array<i64: 4, 32>}, {pipeline_mode = #tpu.pipeline_mode<synchronous>, transform_indices = @transform_2, window_bounds = array<i64: 32, 4>}, {transform_indices = @transform_3, window_bounds = array<i64: 128, 4>}]} {
    %c0 = arith.constant 0 : index
    %c0_0 = arith.constant 0 : index
    %0 = vector.load %arg1[%c0, %c0_0] : memref<128x4xf32, #tpu.memory_space<vmem>>, vector<128x4xf32>
    %c0_1 = arith.constant 0 : index
    %c0_2 = arith.constant 0 : index
    %1 = vector.load %arg2[%c0_1, %c0_2] : memref<4x32xf32, #tpu.memory_space<vmem>>, vector<4x32xf32>
    %c0_3 = arith.constant 0 : index
    %c0_4 = arith.constant 0 : index
    %2 = vector.load %arg3[%c0_3, %c0_4] : memref<32x4xf32, #tpu.memory_space<vmem>>, vector<32x4xf32>
    %3 = arith.mulf %1, %1 : vector<4x32xf32>
    %cst = arith.constant dense<0.000000e+00> : vector<32xf32>
    %4 = vector.multi_reduction <add>, %3, %cst [0] : vector<4x32xf32> to vector<32xf32>
    %5 = vector.shape_cast %4 : vector<32xf32> to vector<1x32xf32>
    %cst_5 = arith.constant dense<0.000000e+00> : vector<128x32xf32>
    %6 = tpu.matmul %0, %1, %cst_5 {dimension_numbers = #tpu.dot_dimension_numbers<[1], [0], [0], [1], [0, 0, 1, 1], [], []>} : vector<128x4xf32>, vector<4x32xf32>, vector<128x32xf32> -> vector<128x32xf32>
    %cst_6 = arith.constant 2.000000e+00 : f32
    %7 = vector.broadcast %cst_6 : f32 to vector<128x32xf32>
    %8 = arith.mulf %7, %6 : vector<128x32xf32>
    %9 = vector.broadcast %5 : vector<1x32xf32> to vector<128x32xf32>
    %10 = arith.subf %9, %8 : vector<128x32xf32>
    %11 = tpu.iota {dimensions = array<i32: 1>} : vector<128x32xi32>
    %12 = arith.sitofp %11 : vector<128x32xi32> to vector<128x32xf32>
    %cst_7 = arith.constant dense<0x7F800000> : vector<128xf32>
    %13 = vector.multi_reduction <minimumf>, %10, %cst_7 [1] : vector<128x32xf32> to vector<128xf32>
    %14 = vector.shape_cast %13 : vector<128xf32> to vector<128x1xf32>
    %15 = vector.broadcast %14 : vector<128x1xf32> to vector<128x32xf32>
    %16 = arith.cmpf ole, %10, %15 : vector<128x32xf32>
    %cst_8 = arith.constant 3.200000e+01 : f32
    %17 = vector.broadcast %cst_8 : f32 to vector<128x32xf32>
    %18 = arith.select %16, %12, %17 : vector<128x32xi1>, vector<128x32xf32>
    %cst_9 = arith.constant dense<0x7F800000> : vector<128xf32>
    %19 = vector.multi_reduction <minimumf>, %18, %cst_9 [1] : vector<128x32xf32> to vector<128xf32>
    %20 = vector.shape_cast %19 : vector<128xf32> to vector<128x1xf32>
    %21 = vector.broadcast %20 : vector<128x1xf32> to vector<128x32xf32>
    %22 = arith.cmpf oeq, %12, %21 : vector<128x32xf32>
    %23 = arith.extui %22 : vector<128x32xi1> to vector<128x32xi32>
    %24 = arith.sitofp %23 : vector<128x32xi32> to vector<128x32xf32>
    %cst_10 = arith.constant dense<0.000000e+00> : vector<128x4xf32>
    %25 = tpu.matmul %24, %2, %cst_10 {dimension_numbers = #tpu.dot_dimension_numbers<[1], [0], [0], [1], [0, 0, 1, 1], [], []>} : vector<128x32xf32>, vector<32x4xf32>, vector<128x4xf32> -> vector<128x4xf32>
    %c0_11 = arith.constant 0 : index
    %c0_12 = arith.constant 0 : index
    %26 = vector.load %arg4[%c0_11, %c0_12] : memref<128x4xf32, #tpu.memory_space<vmem>>, vector<128x4xf32>
    tpu.vector_store %arg4[%c0_11, %c0_12], %25 {strides = array<i32>} : memref<128x4xf32, #tpu.memory_space<vmem>>, vector<128x4xf32>,
    return
  }
  func.func @transform_0(%arg0: i32) -> (i32, i32) {
    %c0_i32 = arith.constant 0 : i32
    %c0_i32_0 = arith.constant 0 : i32
    return %arg0, %c0_i32 : i32, i32
  }
  func.func @transform_1(%arg0: i32) -> (i32, i32) {
    %c0_i32 = arith.constant 0 : i32
    %c0_i32_0 = arith.constant 0 : i32
    %c0_i32_1 = arith.constant 0 : i32
    return %c0_i32, %c0_i32_0 : i32, i32
  }
  func.func @transform_2(%arg0: i32) -> (i32, i32) {
    %c0_i32 = arith.constant 0 : i32
    %c0_i32_0 = arith.constant 0 : i32
    %c0_i32_1 = arith.constant 0 : i32
    return %c0_i32, %c0_i32_0 : i32, i32
  }
  func.func @transform_3(%arg0: i32) -> (i32, i32) {
    %c0_i32 = arith.constant 0 : i32
    %c0_i32_0 = arith.constant 0 : i32
    return %arg0, %c0_i32 : i32, i32
  }
}

</mosaic_0001>

<llo_original>
// kernel: vector_quantize.1
$region0: #{vector_quantize.1}
  #allocation0 [shape = 'u32[]', space=smem, size = 0x4, offset = 0x4, fixed_abs, tag = 'smem constant byte address 0x4 - core index']
  #allocation1 [shape = 'u32[144,128]{1,0:T(1,128)}', space=vmem, size = 0x12000, scoped, tag = 'internal scratch']
  %s0 = inlined_call_operand.vmem [shape: f32[512,4], index: 0, kind: input, shape index: {}]
  %s1 = inlined_call_operand.vmem [shape: f32[4,32], index: 1, kind: input, shape index: {}]
  %s2 = inlined_call_operand.vmem [shape: f32[32,4], index: 2, kind: input, shape index: {}]
  %s3 = inlined_call_operand.vmem [shape: f32[512,4], index: 3, kind: output, shape index: {}]
  %s4 = sld [smem:[#allocation0]]
  $region45: #{vector_quantize.1} parent=0
    _
  %s6 = ssub.s32 1, %s4
  %s7 = scalar_select 0, %s6, %s4
  loop: start=0, step=1, limit=6
  $region2: #{vector_quantize.1} parent=0 // loop_pre_header
    _
  $region3: #{vector_quantize.1} parent=0 // loop_header
    %s9 = sphi 0, %s13
    %p10 = scmp.ge.s32.totalorder %s9, 6
    %s19 = sphi 0, %s21
    %s22 = sphi 0, %s19
    %s23 = sphi 0, %s22
    %s39 = sphi 0, %s23
    %s43 = sphi 0, %s43
    %s45 = sphi 0, %s43
    %s46 = sphi 0, %s45
    %s60 = sphi 0, %s46
    %s64 = sphi 0, %s64
    %s66 = sphi 0, %s64
    %s67 = sphi 0, %s66
    %s81 = sphi 0, %s67
    %s87 = sphi 0, %s89
    %s90 = sphi 0, %s87
    %s91 = sphi 0, %s90
    %s107 = sphi 0, %s91
  $region4: #{vector_quantize.1} parent=0 // loop_header_branch
    %12 = sbr.rel (%p10) target = $region8
  $region5: #{vector_quantize.1} parent=0 // loop_body
    %s14 = ssub.s32 %s9, 1
    %s15 = ssub.s32 %s9, 2
    %s16 = sadd.s32 %s9, 1
    %s17 = ssub.s32 %s9, %s16
    %p18 = scmp.eq.s32.totalorder %s17, 0
    %s20 = sadd.s32 %s19, 1
    %s21 = scalar_select %p18, %s19, %s20
    %p24 = pneg %p18
    %p25 = scmp.eq.s32.totalorder %s9, 3
    %p26 = por %p24, %p25
    %p27 = scmp.ne.s32.totalorder %s19, %s22
    %p28 = scmp.eq.s32.totalorder %s9, 0
    %p29 = por %p27, %p28
    %p30 = scmp.ne.s32.totalorder %s19, %s22
    %p31 = scmp.eq.s32.totalorder %s14, 3
    %p32 = por %p30, %p31
    %p33 = scmp.ne.s32.totalorder %s22, %s23
    %p34 = scmp.eq.s32.totalorder %s14, 0
    %p35 = por %p33, %p34
    %p36 = scmp.ne.s32.totalorder %s22, %s23
    %p37 = scmp.eq.s32.totalorder %s15, 3
    %p38 = por %p36, %p37
    %p40 = scmp.ne.s32.totalorder %s23, %s39
    %p41 = scmp.eq.s32.totalorder %s15, 0
    %p42 = por %p40, %p41
    %s44 = sadd.s32 %s43, 1
    %p47 = scmp.eq.s32.totalorder %s9, 3
    %p48 = scmp.ne.s32.totalorder %s43, %s45
    %p49 = scmp.eq.s32.totalorder %s9, 0
    %p50 = por %p48, %p49
    %p51 = scmp.ne.s32.totalorder %s43, %s45
    %p52 = scmp.eq.s32.totalorder %s14, 3
    %p53 = por %p51, %p52
    %p54 = scmp.ne.s32.totalorder %s45, %s46
    %p55 = scmp.eq.s32.totalorder %s14, 0
    %p56 = por %p54, %p55
    %p57 = scmp.ne.s32.totalorder %s45, %s46
    %p58 = scmp.eq.s32.totalorder %s15, 3
    %p59 = por %p57, %p58
    %p61 = scmp.ne.s32.totalorder %s46, %s60
    %p62 = scmp.eq.s32.totalorder %s15, 0
    %p63 = por %p61, %p62
    %s65 = sadd.s32 %s64, 1
    %p68 = scmp.eq.s32.totalorder %s9, 3
    %p69 = scmp.ne.s32.totalorder %s64, %s66
    %p70 = scmp.eq.s32.totalorder %s9, 0
    %p71 = por %p69, %p70
    %p72 = scmp.ne.s32.totalorder %s64, %s66
    %p73 = scmp.eq.s32.totalorder %s14, 3
    %p74 = por %p72, %p73
    %p75 = scmp.ne.s32.totalorder %s66, %s67
    %p76 = scmp.eq.s32.totalorder %s14, 0
    %p77 = por %p75, %p76
    %p78 = scmp.ne.s32.totalorder %s66, %s67
    %p79 = scmp.eq.s32.totalorder %s15, 3
    %p80 = por %p78, %p79
    %p82 = scmp.ne.s32.totalorder %s67, %s81
    %p83 = scmp.eq.s32.totalorder %s15, 0
    %p84 = por %p82, %p83
    %s85 = ssub.s32 %s9, %s16
    %p86 = scmp.eq.s32.totalorder %s85, 0
    %s88 = sadd.s32 %s87, 1
    %s89 = scalar_select %p86, %s87, %s88
    %p92 = pneg %p86
    %p93 = scmp.eq.s32.totalorder %s9, 3
    %p94 = por %p92, %p93
    %p95 = scmp.ne.s32.totalorder %s87, %s90
    %p96 = scmp.eq.s32.totalorder %s9, 0
    %p97 = por %p95, %p96
    %p98 = scmp.ne.s32.totalorder %s87, %s90
    %p99 = scmp.eq.s32.totalorder %s14, 3
    %p100 = por %p98, %p99
    %p101 = scmp.ne.s32.totalorder %s90, %s91
    %p102 = scmp.eq.s32.totalorder %s14, 0
    %p103 = por %p101, %p102
    %p104 = scmp.ne.s32.totalorder %s90, %s91
    %p105 = scmp.eq.s32.totalorder %s15, 3
    %p106 = por %p104, %p105
    %p108 = scmp.ne.s32.totalorder %s91, %s107
    %p109 = scmp.eq.s32.totalorder %s15, 0
    %p110 = por %p108, %p109
    %p111 = scmp.le.s32.totalorder 1, %s9
    %p112 = scmp.lt.s32.totalorder %s9, 5
    %p113 = pnand %p111, %p112
    %p114 = pneg %p113
    // Predicated region
    $region9: #{vector_quantize.1} parent=5 // pred_check
      _
    $region10: #{vector_quantize.1} parent=5 // pred_check_branch
      %116 = sbr.rel (%p113) target = $region12
    $region11: #{vector_quantize.1} parent=5 // pred_region
      %s117 = ssub.s32 %s9, 1
      // Predicated region
      $region13: #{vector_quantize.1} parent=11 // pred_check
        %p118 = pneg %p56
      $region14: #{vector_quantize.1} parent=11 // pred_check_branch
        %120 = sbr.rel (%p118) target = $region16
      $region15: #{vector_quantize.1} parent=11 // pred_region
        _
      $region16: #{vector_quantize.1} parent=11 // pred_fallthru
        _
      // Predicated region
      $region17: #{vector_quantize.1} parent=11 // pred_check
        %p121 = pneg %p77
      $region18: #{vector_quantize.1} parent=11 // pred_check_branch
        %123 = sbr.rel (%p121) target = $region20
      $region19: #{vector_quantize.1} parent=11 // pred_region
        _
      $region20: #{vector_quantize.1} parent=11 // pred_fallthru
        _
    $region12: #{vector_quantize.1} parent=5 // pred_fallthru
      _
    %p124 = scmp.lt.s32.totalorder %s9, 4
    // Predicated region
    $region21: #{vector_quantize.1} parent=5 // pred_check
      %p125 = pneg %p124
    $region22: #{vector_quantize.1} parent=5 // pred_check_branch
      %127 = sbr.rel (%p125) target = $region24
    $region23: #{vector_quantize.1} parent=5 // pred_region
      // Predicated region
      $region25: #{vector_quantize.1} parent=23 // pred_check
        %p128 = pneg %p29
      $region26: #{vector_quantize.1} parent=23 // pred_check_branch
        %130 = sbr.rel (%p128) target = $region28
      $region27: #{vector_quantize.1} parent=23 // pred_region
        %s131 = smul.u32 16, %s9
        %p132 = scmp.lt.s32.totalorder %s131, 63
        %s133 = scalar_select %p132, %s131, 63
        %s134 = smul.addr %s133, 8
        %s135 = scalar_lea.vmem %s0, %s134
        %s136 = smul.u32 16, %s9
      $region28: #{vector_quantize.1} parent=23 // pred_fallthru
        _
    $region24: #{vector_quantize.1} parent=5 // pred_fallthru
      _
    %p137 = scmp.le.s32.totalorder 1, %s9
    %p138 = scmp.lt.s32.totalorder %s9, 5
    %p139 = pnand %p137, %p138
    %p140 = pneg %p139
    // Predicated region
    $region29: #{vector_quantize.1} parent=5 // pred_check
      _
    $region30: #{vector_quantize.1} parent=5 // pred_check_branch
      %142 = sbr.rel (%p139) target = $region32
    $region31: #{vector_quantize.1} parent=5 // pred_region
      %s143 = ssub.s32 %s9, 1
      %s144 = smul.u32 16, %s14
      %p145 = scmp.lt.s32.totalorder %s144, 63
      %s146 = scalar_select %p145, %s144, 63
      %s147 = smul.addr %s146, 8
      %s148 = scalar_lea.vmem %s0, %s147
      %p149 = pneg %p35
      %p150 = pneg %p32
      %p151 = pneg %p56
      %p152 = pneg %p53
      %p153 = pneg %p77
      %p154 = pneg %p74
      %p155 = pneg %p103
      %p156 = pneg %p100
      %s157 = smul.u32 16, %s14
      %p158 = scmp.lt.s32.totalorder %s157, 63
      %s159 = scalar_select %p158, %s157, 63
      %s160 = smul.addr %s159, 8
      %s161 = scalar_lea.vmem %s3, %s160
      %s162 = smul.u32 16, %s14
      %p163 = scmp.lt.s32.totalorder %s162, 63
      %s164 = scalar_select %p163, %s162, 63
      %s165 = smul.addr %s164, 8
      %s166 = scalar_lea.vmem %s0, %s165
      %s167 = smul.u32 16, %s14
      %s168 = smul.u32 16, %s14
      %p169 = scmp.lt.s32.totalorder %s168, 63
      %s170 = scalar_select %p169, %s168, 63
      %s171 = smul.addr %s170, 8
      %s172 = scalar_lea.vmem %s3, %s171
      %s173 = smul.u32 16, %s14
      %v174 = vld [vmem:[%s166] sm:$0xff]
      %v175 = vld [vmem:[%s166 + $0x8] sm:$0xff]
      %v176 = vld [vmem:[%s166 + $0x10] sm:$0xff]
      %v177 = vld [vmem:[%s166 + $0x18] sm:$0xff]
      %v178 = vld [vmem:[%s166 + $0x20] sm:$0xff]
      %v179 = vld [vmem:[%s166 + $0x28] sm:$0xff]
      %v180 = vld [vmem:[%s166 + $0x30] sm:$0xff]
      %v181 = vld [vmem:[%s166 + $0x38] sm:$0xff]
      %v182 = vld [vmem:[%s166 + $0x40] sm:$0xff]
      %v183 = vld [vmem:[%s166 + $0x48] sm:$0xff]
      %v184 = vld [vmem:[%s166 + $0x50] sm:$0xff]
      %v185 = vld [vmem:[%s166 + $0x58] sm:$0xff]
      %v186 = vld [vmem:[%s166 + $0x60] sm:$0xff]
      %v187 = vld [vmem:[%s166 + $0x68] sm:$0xff]
      %v188 = vld [vmem:[%s166 + $0x70] sm:$0xff]
      %v189 = vld [vmem:[%s166 + $0x78] sm:$0xff]
      %v190 = vld [vmem:[%s1] sm:$0xf]
      %v191 = vld [vmem:[%s2] sm:$0xff]
      %v192 = vld [vmem:[%s2 + $0x8] sm:$0xff]
      %v193 = vld [vmem:[%s2 + $0x10] sm:$0xff]
      %v194 = vld [vmem:[%s2 + $0x18] sm:$0xff]
      %v195 = vmul.f32 %v190, %v190
      %vm196 = vcmask 257024
      %v197 = vsel %vm196, %v195, 0.0
      %v198 = vrot.slane %v197, 4
      %v199 = vadd.f32 %v197, %v198
      %v200 = vrot.slane %v199, 2
      %v201 = vadd.f32 %v199, %v200
      %v202 = vrot.slane %v201, 1
      %v203 = vadd.f32 %v201, %v202
      %vm204 = vcmask 31744
      %v206 = vsel %vm204, %v174, 0
      %v209 = vsel %vm204, %v175, 0
      %v212 = vsel %vm204, %v176, 0
      %v215 = vsel %vm204, %v177, 0
      %v218 = vsel %vm204, %v178, 0
      %v221 = vsel %vm204, %v179, 0
      %v224 = vsel %vm204, %v180, 0
      %v227 = vsel %vm204, %v181, 0
      %v230 = vsel %vm204, %v182, 0
      %v233 = vsel %vm204, %v183, 0
      %v236 = vsel %vm204, %v184, 0
      %v239 = vsel %vm204, %v185, 0
      %v242 = vsel %vm204, %v186, 0
      %v245 = vsel %vm204, %v187, 0
      %v248 = vsel %vm204, %v188, 0
      %v251 = vsel %vm204, %v189, 0
      %vm253 = vcmask 1043456
      %v255 = vsel %vm253, %v190, 0
      %257 = vmatprep.subr.mxu0 0.0
      %258 = vmatpush1.msra.mxu0 %v255
      %259 = vmatprep.subr.mxu0 0.0
      %260 = vmatpush1.msra.mxu0 0.0
      %261 = vmatprep.subr.mxu0 0.0
      %262 = vmatpush1.msra.mxu0 0.0
      %263 = vmatprep.subr.mxu0 0.0
      %264 = vmatpush1.msra.mxu0 0.0
      %265 = vmatprep.subr.mxu0 0.0
      %266 = vmatpush1.msra.mxu0 0.0
      %267 = vmatprep.subr.mxu0 0.0
      %268 = vmatpush1.msra.mxu0 0.0
      %269 = vmatprep.subr.mxu0 0.0
      %270 = vmatpush1.msra.mxu0 0.0
      %271 = vmatprep.subr.mxu0 0.0
      %272 = vmatpush1.msra.mxu0 0.0
      %273 = vmatprep.subr.mxu0 0.0
      %274 = vmatpush1.msra.mxu0 0.0
      %275 = vmatprep.subr.mxu0 0.0
      %276 = vmatpush1.msra.mxu0 0.0
      %277 = vmatprep.subr.mxu0 0.0
      %278 = vmatpush1.msra.mxu0 0.0
      %279 = vmatprep.subr.mxu0 0.0
      %280 = vmatpush1.msra.mxu0 0.0
      %281 = vmatprep.subr.mxu0 0.0
      %282 = vmatpush1.msra.mxu0 0.0
      %283 = vmatprep.subr.mxu0 0.0
      %284 = vmatpush1.msra.mxu0 0.0
      %285 = vmatprep.subr.mxu0 0.0
      %286 = vmatpush1.msra.mxu0 0.0
      %287 = vmatprep.subr.mxu0 0.0
      %288 = vmatpush1.msra.mxu0 0.0
      %289 = vmatprep.subr.mxu0 0.0
      %290 = vmatpush1.msra.mxu0 0.0
      %291 = vmatprep.subr.mxu0 0.0
      %292 = vmatpush1.msra.mxu0 0.0
      %293 = vmatprep.subr.mxu0 0.0
      %294 = vmatpush1.msra.mxu0 0.0
      %295 = vmatprep.subr.mxu0 0.0
      %296 = vmatpush1.msra.mxu0 0.0
      %297 = vmatprep.subr.mxu0 0.0
      %298 = vmatpush1.msra.mxu0 0.0
      %299 = vmatprep.subr.mxu0 0.0
      %300 = vmatpush1.msra.mxu0 0.0
      %301 = vmatprep.subr.mxu0 0.0
      %302 = vmatpush1.msra.mxu0 0.0
      %303 = vmatprep.subr.mxu0 0.0
      %304 = vmatpush1.msra.mxu0 0.0
      %305 = vmatprep.subr.mxu0 0.0
      %306 = vmatpush1.msra.mxu0 0.0
      %307 = vmatprep.subr.mxu0 0.0
      %308 = vmatpush1.msra.mxu0 0.0
      %309 = vmatprep.subr.mxu0 0.0
      %310 = vmatpush1.msra.mxu0 0.0
      %311 = vmatprep.subr.mxu0 0.0
      %312 = vmatpush1.msra.mxu0 0.0
      %313 = vmatprep.subr.mxu0 0.0
      %314 = vmatpush1.msra.mxu0 0.0
      %315 = vmatprep.subr.mxu0 0.0
      %316 = vmatpush1.msra.mxu0 0.0
      %317 = vmatprep.subr.mxu0 0.0
      %318 = vmatpush1.msra.mxu0 0.0
      %319 = vmatprep.subr.mxu0 0.0
      %320 = vmatpush1.msra.mxu0 0.0
      %321 = vmatprep.mubr.f32.mxu0 0.0
      %322 = vmatmul.mubr.f32.gmra.mrb[0].mxu0 %v206
      %v323 = vpop.f32.mrb[0].mxu0
      %v324 = vadd.f32 0.0, %v323
      %v325 = vpop.f32.mrb[0].mxu0
      %326 = vmatprep.mubr.f32.mxu0 0.0
      %327 = vmatmul.mubr.f32.gmra.mrb[0].mxu0 %v209
      %v328 = vpop.f32.mrb[0].mxu0
      %v329 = vadd.f32 0.0, %v328
      %v330 = vpop.f32.mrb[0].mxu0
      %331 = vmatprep.mubr.f32.mxu0 0.0
      %332 = vmatmul.mubr.f32.gmra.mrb[0].mxu0 %v212
      %v333 = vpop.f32.mrb[0].mxu0
      %v334 = vadd.f32 0.0, %v333
      %v335 = vpop.f32.mrb[0].mxu0
      %336 = vmatprep.mubr.f32.mxu0 0.0
      %337 = vmatmul.mubr.f32.gmra.mrb[0].mxu0 %v215
      %v338 = vpop.f32.mrb[0].mxu0
      %v339 = vadd.f32 0.0, %v338
      %v340 = vpop.f32.mrb[0].mxu0
      %341 = vmatprep.mubr.f32.mxu0 0.0
      %342 = vmatmul.mubr.f32.gmra.mrb[0].mxu0 %v218
      %v343 = vpop.f32.mrb[0].mxu0
      %v344 = vadd.f32 0.0, %v343
      %v345 = vpop.f32.mrb[0].mxu0
      %346 = vmatprep.mubr.f32.mxu0 0.0
      %347 = vmatmul.mubr.f32.gmra.mrb[0].mxu0 %v221
      %v348 = vpop.f32.mrb[0].mxu0
      %v349 = vadd.f32 0.0, %v348
      %v350 = vpop.f32.mrb[0].mxu0
      %351 = vmatprep.mubr.f32.mxu0 0.0
      %352 = vmatmul.mubr.f32.gmra.mrb[0].mxu0 %v224
      %v353 = vpop.f32.mrb[0].mxu0
      %v354 = vadd.f32 0.0, %v353
      %v355 = vpop.f32.mrb[0].mxu0
      %356 = vmatprep.mubr.f32.mxu0 0.0
      %357 = vmatmul.mubr.f32.gmra.mrb[0].mxu0 %v227
      %v358 = vpop.f32.mrb[0].mxu0
      %v359 = vadd.f32 0.0, %v358
      %v360 = vpop.f32.mrb[0].mxu0
      %361 = vmatprep.mubr.f32.mxu0 0.0
      %362 = vmatmul.mubr.f32.gmra.mrb[0].mxu0 %v230
      %v363 = vpop.f32.mrb[0].mxu0
      %v364 = vadd.f32 0.0, %v363
      %v365 = vpop.f32.mrb[0].mxu0
      %366 = vmatprep.mubr.f32.mxu0 0.0
      %367 = vmatmul.mubr.f32.gmra.mrb[0].mxu0 %v233
      %v368 = vpop.f32.mrb[0].mxu0
      %v369 = vadd.f32 0.0, %v368
      %v370 = vpop.f32.mrb[0].mxu0
      %371 = vmatprep.mubr.f32.mxu0 0.0
      %372 = vmatmul.mubr.f32.gmra.mrb[0].mxu0 %v236
      %v373 = vpop.f32.mrb[0].mxu0
      %v374 = vadd.f32 0.0, %v373
      %v375 = vpop.f32.mrb[0].mxu0
      %376 = vmatprep.mubr.f32.mxu0 0.0
      %377 = vmatmul.mubr.f32.gmra.mrb[0].mxu0 %v239
      %v378 = vpop.f32.mrb[0].mxu0
      %v379 = vadd.f32 0.0, %v378
      %v380 = vpop.f32.mrb[0].mxu0
      %381 = vmatprep.mubr.f32.mxu0 0.0
      %382 = vmatmul.mubr.f32.gmra.mrb[0].mxu0 %v242
      %v383 = vpop.f32.mrb[0].mxu0
      %v384 = vadd.f32 0.0, %v383
      %v385 = vpop.f32.mrb[0].mxu0
      %386 = vmatprep.mubr.f32.mxu0 0.0
      %387 = vmatmul.mubr.f32.gmra.mrb[0].mxu0 %v245
      %v388 = vpop.f32.mrb[0].mxu0
      %v389 = vadd.f32 0.0, %v388
      %v390 = vpop.f32.mrb[0].mxu0
      %391 = vmatprep.mubr.f32.mxu0 0.0
      %392 = vmatmul.mubr.f32.gmra.mrb[0].mxu0 %v248
      %v393 = vpop.f32.mrb[0].mxu0
      %v394 = vadd.f32 0.0, %v393
      %v395 = vpop.f32.mrb[0].mxu0
      %396 = vmatprep.mubr.f32.mxu0 0.0
      %397 = vmatmul.mubr.f32.gmra.mrb[0].mxu0 %v251
      %v398 = vpop.f32.mrb[0].mxu0
      %v399 = vadd.f32 0.0, %v398
      %v400 = vpop.f32.mrb[0].mxu0
      %401 = vdwg.mxu0
      %v402 = vmul.f32 %v324, 2.0
      %v403 = vmul.f32 %v329, 2.0
      %v404 = vmul.f32 %v334, 2.0
      %v405 = vmul.f32 %v339, 2.0
      %v406 = vmul.f32 %v344, 2.0
      %v407 = vmul.f32 %v349, 2.0
      %v408 = vmul.f32 %v354, 2.0
      %v409 = vmul.f32 %v359, 2.0
      %v410 = vmul.f32 %v364, 2.0
      %v411 = vmul.f32 %v369, 2.0
      %v412 = vmul.f32 %v374, 2.0
      %v413 = vmul.f32 %v379, 2.0
      %v414 = vmul.f32 %v384, 2.0
      %v415 = vmul.f32 %v389, 2.0
      %v416 = vmul.f32 %v394, 2.0
      %v417 = vmul.f32 %v399, 2.0
      %v418 = vsub.f32 %v203, %v402
      %v419 = vsub.f32 %v203, %v403
      %v420 = vsub.f32 %v203, %v404
      %v421 = vsub.f32 %v203, %v405
      %v422 = vsub.f32 %v203, %v406
      %v423 = vsub.f32 %v203, %v407
      %v424 = vsub.f32 %v203, %v408
      %v425 = vsub.f32 %v203, %v409
      %v426 = vsub.f32 %v203, %v410
      %v427 = vsub.f32 %v203, %v411
      %v428 = vsub.f32 %v203, %v412
      %v429 = vsub.f32 %v203, %v413
      %v430 = vsub.f32 %v203, %v414
      %v431 = vsub.f32 %v203, %v415
      %v432 = vsub.f32 %v203, %v416
      %v433 = vsub.f32 %v203, %v417
      %v434 = vlaneseq
      %v435 = vand.u32 %v434, 127
      %v436 = vcvt.s32.f32 %v435
      %vm437 = vcmask 261120
      %v438 = vsel %vm437, %v418, inf
      %439 = vmin.xlane.f32.xlu0 %v438
      %v440 = vpop.xlane.xlu0 %439
      %v441 = vsel %vm437, %v419, inf
      %442 = vmin.xlane.f32.xlu0 %v441
      %v443 = vpop.xlane.xlu0 %442
      %v444 = vsel %vm437, %v420, inf
      %445 = vmin.xlane.f32.xlu0 %v444
      %v446 = vpop.xlane.xlu0 %445
      %v447 = vsel %vm437, %v421, inf
      %448 = vmin.xlane.f32.xlu0 %v447
      %v449 = vpop.xlane.xlu0 %448
      %v450 = vsel %vm437, %v422, inf
      %451 = vmin.xlane.f32.xlu0 %v450
      %v452 = vpop.xlane.xlu0 %451
      %v453 = vsel %vm437, %v423, inf
      %454 = vmin.xlane.f32.xlu0 %v453
      %v455 = vpop.xlane.xlu0 %454
      %v456 = vsel %vm437, %v424, inf
      %457 = vmin.xlane.f32.xlu0 %v456
      %v458 = vpop.xlane.xlu0 %457
      %v459 = vsel %vm437, %v425, inf
      %460 = vmin.xlane.f32.xlu0 %v459
      %v461 = vpop.xlane.xlu0 %460
      %v462 = vsel %vm437, %v426, inf
      %463 = vmin.xlane.f32.xlu0 %v462
      %v464 = vpop.xlane.xlu0 %463
      %v465 = vsel %vm437, %v427, inf
      %466 = vmin.xlane.f32.xlu0 %v465
      %v467 = vpop.xlane.xlu0 %466
      %v468 = vsel %vm437, %v428, inf
      %469 = vmin.xlane.f32.xlu0 %v468
      %v470 = vpop.xlane.xlu0 %469
      %v471 = vsel %vm437, %v429, inf
      %472 = vmin.xlane.f32.xlu0 %v471
      %v473 = vpop.xlane.xlu0 %472
      %v474 = vsel %vm437, %v430, inf
      %475 = vmin.xlane.f32.xlu0 %v474
      %v476 = vpop.xlane.xlu0 %475
      %v477 = vsel %vm437, %v431, inf
      %478 = vmin.xlane.f32.xlu0 %v477
      %v479 = vpop.xlane.xlu0 %478
      %v480 = vsel %vm437, %v432, inf
      %481 = vmin.xlane.f32.xlu0 %v480
      %v482 = vpop.xlane.xlu0 %481
      %v483 = vsel %vm437, %v433, inf
      %484 = vmin.xlane.f32.xlu0 %v483
      %v485 = vpop.xlane.xlu0 %484
      %vm486 = vcmp.le.f32.partialorder %v418, %v440
      %vm487 = vcmp.le.f32.partialorder %v419, %v443
      %vm488 = vcmp.le.f32.partialorder %v420, %v446
      %vm489 = vcmp.le.f32.partialorder %v421, %v449
      %vm490 = vcmp.le.f32.partialorder %v422, %v452
      %vm491 = vcmp.le.f32.partialorder %v423, %v455
      %vm492 = vcmp.le.f32.partialorder %v424, %v458
      %vm493 = vcmp.le.f32.partialorder %v425, %v461
      %vm494 = vcmp.le.f32.partialorder %v426, %v464
      %vm495 = vcmp.le.f32.partialorder %v427, %v467
      %vm496 = vcmp.le.f32.partialorder %v428, %v470
      %vm497 = vcmp.le.f32.partialorder %v429, %v473
      %vm498 = vcmp.le.f32.partialorder %v430, %v476
      %vm499 = vcmp.le.f32.partialorder %v431, %v479
      %vm500 = vcmp.le.f32.partialorder %v432, %v482
      %vm501 = vcmp.le.f32.partialorder %v433, %v485
      %v502 = vsel %vm486, %v436, 32.0
      %v503 = vsel %vm487, %v436, 32.0
      %v504 = vsel %vm488, %v436, 32.0
      %v505 = vsel %vm489, %v436, 32.0
      %v506 = vsel %vm490, %v436, 32.0
      %v507 = vsel %vm491, %v436, 32.0
      %v508 = vsel %vm492, %v436, 32.0
      %v509 = vsel %vm493, %v436, 32.0
      %v510 = vsel %vm494, %v436, 32.0
      %v511 = vsel %vm495, %v436, 32.0
      %v512 = vsel %vm496, %v436, 32.0
      %v513 = vsel %vm497, %v436, 32.0
      %v514 = vsel %vm498, %v436, 32.0
      %v515 = vsel %vm499, %v436, 32.0
      %v516 = vsel %vm500, %v436, 32.0
      %v517 = vsel %vm501, %v436, 32.0
      %v518 = vsel %vm437, %v502, inf
      %519 = vmin.xlane.f32.xlu0 %v518
      %v520 = vpop.xlane.xlu0 %519
      %v521 = vsel %vm437, %v503, inf
      %522 = vmin.xlane.f32.xlu0 %v521
      %v523 = vpop.xlane.xlu0 %522
      %v524 = vsel %vm437, %v504, inf
      %525 = vmin.xlane.f32.xlu0 %v524
      %v526 = vpop.xlane.xlu0 %525
      %v527 = vsel %vm437, %v505, inf
      %528 = vmin.xlane.f32.xlu0 %v527
      %v529 = vpop.xlane.xlu0 %528
      %v530 = vsel %vm437, %v506, inf
      %531 = vmin.xlane.f32.xlu0 %v530
      %v532 = vpop.xlane.xlu0 %531
      %v533 = vsel %vm437, %v507, inf
      %534 = vmin.xlane.f32.xlu0 %v533
      %v535 = vpop.xlane.xlu0 %534
      %v536 = vsel %vm437, %v508, inf
      %537 = vmin.xlane.f32.xlu0 %v536
      %v538 = vpop.xlane.xlu0 %537
      %v539 = vsel %vm437, %v509, inf
      %540 = vmin.xlane.f32.xlu0 %v539
      %v541 = vpop.xlane.xlu0 %540
      %v542 = vsel %vm437, %v510, inf
      %543 = vmin.xlane.f32.xlu0 %v542
      %v544 = vpop.xlane.xlu0 %543
      %v545 = vsel %vm437, %v511, inf
      %546 = vmin.xlane.f32.xlu0 %v545
      %v547 = vpop.xlane.xlu0 %546
      %v548 = vsel %vm437, %v512, inf
      %549 = vmin.xlane.f32.xlu0 %v548
      %v550 = vpop.xlane.xlu0 %549
      %v551 = vsel %vm437, %v513, inf
      %552 = vmin.xlane.f32.xlu0 %v551
      %v553 = vpop.xlane.xlu0 %552
      %v554 = vsel %vm437, %v514, inf
      %555 = vmin.xlane.f32.xlu0 %v554
      %v556 = vpop.xlane.xlu0 %555
      %v557 = vsel %vm437, %v515, inf
      %558 = vmin.xlane.f32.xlu0 %v557
      %v559 = vpop.xlane.xlu0 %558
      %v560 = vsel %vm437, %v516, inf
      %561 = vmin.xlane.f32.xlu0 %v560
      %v562 = vpop.xlane.xlu0 %561
      %v563 = vsel %vm437, %v517, inf
      %564 = vmin.xlane.f32.xlu0 %v563
      %v565 = vpop.xlane.xlu0 %564
      %vm566 = vcmp.eq.f32.partialorder %v436, %v520
      %vm567 = vcmp.eq.f32.partialorder %v436, %v523
      %vm568 = vcmp.eq.f32.partialorder %v436, %v526
      %vm569 = vcmp.eq.f32.partialorder %v436, %v529
      %vm570 = vcmp.eq.f32.partialorder %v436, %v532
      %vm571 = vcmp.eq.f32.partialorder %v436, %v535
      %vm572 = vcmp.eq.f32.partialorder %v436, %v538
      %vm573 = vcmp.eq.f32.partialorder %v436, %v541
      %vm574 = vcmp.eq.f32.partialorder %v436, %v544
      %vm575 = vcmp.eq.f32.partialorder %v436, %v547
      %vm576 = vcmp.eq.f32.partialorder %v436, %v550
      %vm577 = vcmp.eq.f32.partialorder %v436, %v553
      %vm578 = vcmp.eq.f32.partialorder %v436, %v556
      %vm579 = vcmp.eq.f32.partialorder %v436, %v559
      %vm580 = vcmp.eq.f32.partialorder %v436, %v562
      %vm581 = vcmp.eq.f32.partialorder %v436, %v565
      %v582 = vsel %vm566, 1, 0
      %v583 = vsel %vm567, 1, 0
      %v584 = vsel %vm568, 1, 0
      %v585 = vsel %vm569, 1, 0
      %v586 = vsel %vm570, 1, 0
      %v587 = vsel %vm571, 1, 0
      %v588 = vsel %vm572, 1, 0
      %v589 = vsel %vm573, 1, 0
      %v590 = vsel %vm574, 1, 0
      %v591 = vsel %vm575, 1, 0
      %v592 = vsel %vm576, 1, 0
      %v593 = vsel %vm577, 1, 0
      %v594 = vsel %vm578, 1, 0
      %v595 = vsel %vm579, 1, 0
      %v596 = vsel %vm580, 1, 0
      %v597 = vsel %vm581, 1, 0
      %v598 = vcvt.s32.f32 %v582
      %v599 = vcvt.s32.f32 %v583
      %v600 = vcvt.s32.f32 %v584
      %v601 = vcvt.s32.f32 %v585
      %v602 = vcvt.s32.f32 %v586
      %v603 = vcvt.s32.f32 %v587
      %v604 = vcvt.s32.f32 %v588
      %v605 = vcvt.s32.f32 %v589
      %v606 = vcvt.s32.f32 %v590
      %v607 = vcvt.s32.f32 %v591
      %v608 = vcvt.s32.f32 %v592
      %v609 = vcvt.s32.f32 %v593
      %v610 = vcvt.s32.f32 %v594
      %v611 = vcvt.s32.f32 %v595
      %v612 = vcvt.s32.f32 %v596
      %v613 = vcvt.s32.f32 %v597
      %v615 = vsel %vm437, %v598, 0
      %v618 = vsel %vm437, %v599, 0
      %v621 = vsel %vm437, %v600, 0
      %v624 = vsel %vm437, %v601, 0
      %v627 = vsel %vm437, %v602, 0
      %v630 = vsel %vm437, %v603, 0
      %v633 = vsel %vm437, %v604, 0
      %v636 = vsel %vm437, %v605, 0
      %v639 = vsel %vm437, %v606, 0
      %v642 = vsel %vm437, %v607, 0
      %v645 = vsel %vm437, %v608, 0
      %v648 = vsel %vm437, %v609, 0
      %v651 = vsel %vm437, %v610, 0
      %v654 = vsel %vm437, %v611, 0
      %v657 = vsel %vm437, %v612, 0
      %v660 = vsel %vm437, %v613, 0
      %662 = vmatprep.subr.mxu0 0.0
      %663 = vmatpush1.msra.mxu0 %v191
      %664 = vmatprep.subr.mxu0 0.0
      %665 = vmatpush1.msra.mxu0 %v192
      %666 = vmatprep.subr.mxu0 0.0
      %667 = vmatpush1.msra.mxu0 %v193
      %668 = vmatprep.subr.mxu0 0.0
      %669 = vmatpush1.msra.mxu0 %v194
      %670 = vmatprep.subr.mxu0 0.0
      %671 = vmatpush1.msra.mxu0 0.0
      %672 = vmatprep.subr.mxu0 0.0
      %673 = vmatpush1.msra.mxu0 0.0
      %674 = vmatprep.subr.mxu0 0.0
      %675 = vmatpush1.msra.mxu0 0.0
      %676 = vmatprep.subr.mxu0 0.0
      %677 = vmatpush1.msra.mxu0 0.0
      %678 = vmatprep.subr.mxu0 0.0
      %679 = vmatpush1.msra.mxu0 0.0
      %680 = vmatprep.subr.mxu0 0.0
      %681 = vmatpush1.msra.mxu0 0.0
      %682 = vmatprep.subr.mxu0 0.0
      %683 = vmatpush1.msra.mxu0 0.0
      %684 = vmatprep.subr.mxu0 0.0
      %685 = vmatpush1.msra.mxu0 0.0
      %686 = vmatprep.subr.mxu0 0.0
      %687 = vmatpush1.msra.mxu0 0.0
      %688 = vmatprep.subr.mxu0 0.0
      %689 = vmatpush1.msra.mxu0 0.0
      %690 = vmatprep.subr.mxu0 0.0
      %691 = vmatpush1.msra.mxu0 0.0
      %692 = vmatprep.subr.mxu0 0.0
      %693 = vmatpush1.msra.mxu0 0.0
      %694 = vmatprep.subr.mxu0 0.0
      %695 = vmatpush1.msra.mxu0 0.0
      %696 = vmatprep.subr.mxu0 0.0
      %697 = vmatpush1.msra.mxu0 0.0
      %698 = vmatprep.subr.mxu0 0.0
      %699 = vmatpush1.msra.mxu0 0.0
      %700 = vmatprep.subr.mxu0 0.0
      %701 = vmatpush1.msra.mxu0 0.0
      %702 = vmatprep.subr.mxu0 0.0
      %703 = vmatpush1.msra.mxu0 0.0
      %704 = vmatprep.subr.mxu0 0.0
      %705 = vmatpush1.msra.mxu0 0.0
      %706 = vmatprep.subr.mxu0 0.0
      %707 = vmatpush1.msra.mxu0 0.0
      %708 = vmatprep.subr.mxu0 0.0
      %709 = vmatpush1.msra.mxu0 0.0
      %710 = vmatprep.subr.mxu0 0.0
      %711 = vmatpush1.msra.mxu0 0.0
      %712 = vmatprep.subr.mxu0 0.0
      %713 = vmatpush1.msra.mxu0 0.0
      %714 = vmatprep.subr.mxu0 0.0
      %715 = vmatpush1.msra.mxu0 0.0
      %716 = vmatprep.subr.mxu0 0.0
      %717 = vmatpush1.msra.mxu0 0.0
      %718 = vmatprep.subr.mxu0 0.0
      %719 = vmatpush1.msra.mxu0 0.0
      %720 = vmatprep.subr.mxu0 0.0
      %721 = vmatpush1.msra.mxu0 0.0
      %722 = vmatprep.subr.mxu0 0.0
      %723 = vmatpush1.msra.mxu0 0.0
      %724 = vmatprep.subr.mxu0 0.0
      %725 = vmatpush1.msra.mxu0 0.0
      %726 = vmatprep.mubr.f32.mxu0 0.0
      %727 = vmatmul.mubr.f32.gmra.mrb[0].mxu0 %v615
      %v728 = vpop.f32.mrb[0].mxu0
      %v729 = vadd.f32 0.0, %v728
      %v730 = vpop.f32.mrb[0].mxu0
      %731 = vmatprep.mubr.f32.mxu0 0.0
      %732 = vmatmul.mubr.f32.gmra.mrb[0].mxu0 %v618
      %v733 = vpop.f32.mrb[0].mxu0
      %v734 = vadd.f32 0.0, %v733
      %v735 = vpop.f32.mrb[0].mxu0
      %736 = vmatprep.mubr.f32.mxu0 0.0
      %737 = vmatmul.mubr.f32.gmra.mrb[0].mxu0 %v621
      %v738 = vpop.f32.mrb[0].mxu0
      %v739 = vadd.f32 0.0, %v738
      %v740 = vpop.f32.mrb[0].mxu0
      %741 = vmatprep.mubr.f32.mxu0 0.0
      %742 = vmatmul.mubr.f32.gmra.mrb[0].mxu0 %v624
      %v743 = vpop.f32.mrb[0].mxu0
      %v744 = vadd.f32 0.0, %v743
      %v745 = vpop.f32.mrb[0].mxu0
      %746 = vmatprep.mubr.f32.mxu0 0.0
      %747 = vmatmul.mubr.f32.gmra.mrb[0].mxu0 %v627
      %v748 = vpop.f32.mrb[0].mxu0
      %v749 = vadd.f32 0.0, %v748
      %v750 = vpop.f32.mrb[0].mxu0
      %751 = vmatprep.mubr.f32.mxu0 0.0
      %752 = vmatmul.mubr.f32.gmra.mrb[0].mxu0 %v630
      %v753 = vpop.f32.mrb[0].mxu0
      %v754 = vadd.f32 0.0, %v753
      %v755 = vpop.f32.mrb[0].mxu0
      %756 = vmatprep.mubr.f32.mxu0 0.0
      %757 = vmatmul.mubr.f32.gmra.mrb[0].mxu0 %v633
      %v758 = vpop.f32.mrb[0].mxu0
      %v759 = vadd.f32 0.0, %v758
      %v760 = vpop.f32.mrb[0].mxu0
      %761 = vmatprep.mubr.f32.mxu0 0.0
      %762 = vmatmul.mubr.f32.gmra.mrb[0].mxu0 %v636
      %v763 = vpop.f32.mrb[0].mxu0
      %v764 = vadd.f32 0.0, %v763
      %v765 = vpop.f32.mrb[0].mxu0
      %766 = vmatprep.mubr.f32.mxu0 0.0
      %767 = vmatmul.mubr.f32.gmra.mrb[0].mxu0 %v639
      %v768 = vpop.f32.mrb[0].mxu0
      %v769 = vadd.f32 0.0, %v768
      %v770 = vpop.f32.mrb[0].mxu0
      %771 = vmatprep.mubr.f32.mxu0 0.0
      %772 = vmatmul.mubr.f32.gmra.mrb[0].mxu0 %v642
      %v773 = vpop.f32.mrb[0].mxu0
      %v774 = vadd.f32 0.0, %v773
      %v775 = vpop.f32.mrb[0].mxu0
      %776 = vmatprep.mubr.f32.mxu0 0.0
      %777 = vmatmul.mubr.f32.gmra.mrb[0].mxu0 %v645
      %v778 = vpop.f32.mrb[0].mxu0
      %v779 = vadd.f32 0.0, %v778
      %v780 = vpop.f32.mrb[0].mxu0
      %781 = vmatprep.mubr.f32.mxu0 0.0
      %782 = vmatmul.mubr.f32.gmra.mrb[0].mxu0 %v648
      %v783 = vpop.f32.mrb[0].mxu0
      %v784 = vadd.f32 0.0, %v783
      %v785 = vpop.f32.mrb[0].mxu0
      %786 = vmatprep.mubr.f32.mxu0 0.0
      %787 = vmatmul.mubr.f32.gmra.mrb[0].mxu0 %v651
      %v788 = vpop.f32.mrb[0].mxu0
      %v789 = vadd.f32 0.0, %v788
      %v790 = vpop.f32.mrb[0].mxu0
      %791 = vmatprep.mubr.f32.mxu0 0.0
      %792 = vmatmul.mubr.f32.gmra.mrb[0].mxu0 %v654
      %v793 = vpop.f32.mrb[0].mxu0
      %v794 = vadd.f32 0.0, %v793
      %v795 = vpop.f32.mrb[0].mxu0
      %796 = vmatprep.mubr.f32.mxu0 0.0
      %797 = vmatmul.mubr.f32.gmra.mrb[0].mxu0 %v657
      %v798 = vpop.f32.mrb[0].mxu0
      %v799 = vadd.f32 0.0, %v798
      %v800 = vpop.f32.mrb[0].mxu0
      %801 = vmatprep.mubr.f32.mxu0 0.0
      %802 = vmatmul.mubr.f32.gmra.mrb[0].mxu0 %v660
      %v803 = vpop.f32.mrb[0].mxu0
      %v804 = vadd.f32 0.0, %v803
      %v805 = vpop.f32.mrb[0].mxu0
      %806 = vdwg.mxu0
      %807 = vst.msk [vmem:[%s172] sm:$0xff] %vm204, %v729
      %808 = vst.msk [vmem:[%s172 + $0x8] sm:$0xff] %vm204, %v734
      %809 = vst.msk [vmem:[%s172 + $0x10] sm:$0xff] %vm204, %v739
      %810 = vst.msk [vmem:[%s172 + $0x18] sm:$0xff] %vm204, %v744
      %811 = vst.msk [vmem:[%s172 + $0x20] sm:$0xff] %vm204, %v749
      %812 = vst.msk [vmem:[%s172 + $0x28] sm:$0xff] %vm204, %v754
      %813 = vst.msk [vmem:[%s172 + $0x30] sm:$0xff] %vm204, %v759
      %814 = vst.msk [vmem:[%s172 + $0x38] sm:$0xff] %vm204, %v764
      %815 = vst.msk [vmem:[%s172 + $0x40] sm:$0xff] %vm204, %v769
      %816 = vst.msk [vmem:[%s172 + $0x48] sm:$0xff] %vm204, %v774
      %817 = vst.msk [vmem:[%s172 + $0x50] sm:$0xff] %vm204, %v779
      %818 = vst.msk [vmem:[%s172 + $0x58] sm:$0xff] %vm204, %v784
      %819 = vst.msk [vmem:[%s172 + $0x60] sm:$0xff] %vm204, %v789
      %820 = vst.msk [vmem:[%s172 + $0x68] sm:$0xff] %vm204, %v794
      %821 = vst.msk [vmem:[%s172 + $0x70] sm:$0xff] %vm204, %v799
      %822 = vst.msk [vmem:[%s172 + $0x78] sm:$0xff] %vm204, %v804
      %s823 = smul.u32 16, %s14
      %p824 = scmp.lt.s32.totalorder %s823, 63
      %s825 = scalar_select %p824, %s823, 63
      %s826 = smul.addr %s825, 8
      %s827 = scalar_lea.vmem %s3, %s826
      // Predicated region
      $region33: #{vector_quantize.1} parent=31 // pred_check
        %p828 = pneg %p100
      $region34: #{vector_quantize.1} parent=31 // pred_check_branch
        %830 = sbr.rel (%p828) target = $region36
      $region35: #{vector_quantize.1} parent=31 // pred_region
        %s831 = smul.u32 16, %s14
      $region36: #{vector_quantize.1} parent=31 // pred_fallthru
        _
    $region32: #{vector_quantize.1} parent=5 // pred_fallthru
      _
    %p832 = scmp.le.s32.totalorder 2, %s9
    // Predicated region
    $region37: #{vector_quantize.1} parent=5 // pred_check
      %p833 = pneg %p832
    $region38: #{vector_quantize.1} parent=5 // pred_check_branch
      %835 = sbr.rel (%p833) target = $region40
    $region39: #{vector_quantize.1} parent=5 // pred_region
      %s836 = ssub.s32 %s9, 2
      // Predicated region
      $region41: #{vector_quantize.1} parent=39 // pred_check
        %p837 = pneg %p106
      $region42: #{vector_quantize.1} parent=39 // pred_check_branch
        %839 = sbr.rel (%p837) target = $region44
      $region43: #{vector_quantize.1} parent=39 // pred_region
        %s840 = smul.u32 16, %s15
        %p841 = scmp.lt.s32.totalorder %s840, 63
        %s842 = scalar_select %p841, %s840, 63
        %s843 = smul.addr %s842, 8
        %s844 = scalar_lea.vmem %s3, %s843
      $region44: #{vector_quantize.1} parent=39 // pred_fallthru
        _
    $region40: #{vector_quantize.1} parent=5 // pred_fallthru
      _
  $region6: #{vector_quantize.1} parent=0 // loop_footer
    %s13 = sadd.s32 1, %s9
  $region7: #{vector_quantize.1} parent=0 // loop_footer_branch
    %8 = sbr.rel target = $region3
  $region8: #{vector_quantize.1} parent=0 // loop_exit
    _

</llo_original>
